<compile_context>
chip_gen: v6e
topology: v6e:2x2x1
jax: 0.10.0
libtpu: 0.0.40
codegen_flags: <defaults>
</compile_context>

<pallas_src>
import functools
import math

import jax
import jax.numpy as jnp
import numpy as np
from jax.experimental import pallas as pl
from jax.experimental.pallas import tpu as pltpu


# ----------------------------------------------------------------------------- kernel

def _make_fused_kernel(has_down):
    """Build the fused forward kernel.

    Ref order: x_tcn, x_clk, per block [m1, b1, m2, b2, (md, bd)?], wh, wclk,
    bout, out_ref.  `has_down[i]` says whether block i has a 1x1 downsample conv.
    """

    def kernel(*refs):
        out_ref = refs[-1]
        it = iter(refs[:-1])
        h = next(it)[...]            # (B, Cin0*L) time-flattened TCN input
        clk = next(it)[...]          # (B, 2) pre-rotation (cos, sin) clock features

        # TemporalConvNet: every conv(+chomp) is one matmul on flattened (c*L+t) lanes.
        for down in has_down:
            m1 = next(it)
            b1 = next(it)
            m2 = next(it)
            b2 = next(it)
            h1 = jnp.maximum(
                jnp.dot(h, m1[...], preferred_element_type=jnp.float32) + b1[...], 0.0)
            h2 = jnp.maximum(
                jnp.dot(h1, m2[...], preferred_element_type=jnp.float32) + b2[...], 0.0)
            if down:
                md = next(it)
                bd = next(it)
                res = jnp.dot(h, md[...], preferred_element_type=jnp.float32) + bd[...]
            else:
                res = h
            h = jnp.maximum(h2 + res, 0.0)

        # Head: `wh` picks the last time step of every channel and applies linear1's
        # TCN-feature columns; the clock path (TimePassing rotation, linear1's clock
        # columns, and the raw-y passthrough into the output) is folded into `wclk`
        # and evaluated on the VPU (2-term expansion, exact f32).
        wh = next(it)[...]           # (Cf*L, O+2)
        wclk = next(it)[...]         # (2, O+2)
        bout = next(it)[...]         # (1, O+2)
        out = jnp.dot(h, wh, preferred_element_type=jnp.float32)
        out = out + clk[:, 0:1] * wclk[0:1, :] + clk[:, 1:2] * wclk[1:2, :]
        out = out + bout
        out_ref[...] = out.astype(out_ref.dtype)

    return kernel


# ----------------------------------------------------------------------------- prep

def _causal_conv_matrix(w, seq_len, dilation):
    """Lower causal dilated Conv1d(+Chomp1d) to a dense matrix.

    w: (Cout, Cin, K) PyTorch Conv1d weight.  Returns M of shape (Cin*L, Cout*L)
    such that  x.reshape(B, Cin*L) @ M  ==  chomp(conv1d(x, padding=(K-1)*dilation))
    flattened channel-major (index c*L + t).
    """
    c_out, c_in, K = w.shape
    L = seq_len
    t = jnp.arange(L)
    M = jnp.zeros((c_in, L, c_out, L), jnp.float32)
    for j in range(K):
        shift = (K - 1 - j) * dilation
        # S[u, tt] = 1  iff  u == tt - shift   (causal left zero-padding is implicit)
        S = (t[:, None] + shift == t[None, :]).astype(jnp.float32)
        M = M + w[:, :, j].T[:, None, :, None] * S[None, :, None, :]
    return M.reshape(c_in * L, c_out * L)


def prepare_fused_params(params, *, output_size, seq_len, dt_sec):
    """One-time preprocessing (hoisted out of the forward path): fold conv taps,
    chomp, the head concat/Linear and the TimePassing rotation into dense matrices
    so the forward pass is a single kernel with no per-call weight reshapes."""
    L = seq_len
    O = output_size
    flat, has_down = [], []
    out_ch = output_size
    for i, blk in enumerate(params["blocks"]):
        d = 2 ** i
        out_ch = blk["w1"].shape[0]
        flat += [
            _causal_conv_matrix(blk["w1"], L, d),
            jnp.repeat(blk["b1"], L).reshape(1, out_ch * L),
            _causal_conv_matrix(blk["w2"], L, d),
            jnp.repeat(blk["b2"], L).reshape(1, out_ch * L),
        ]
        if blk["wd"] is not None:
            flat += [
                _causal_conv_matrix(blk["wd"], L, 1),
                jnp.repeat(blk["bd"], L).reshape(1, out_ch * L),
            ]
            has_down.append(True)
        else:
            has_down.append(False)
    c_f = out_ch

    lw, lb = params["lin_w"], params["lin_b"]        # (O, c_f+2), (O,)
    lw_h, lw_y = lw[:, :c_f], lw[:, c_f:]
    # wh: select last time step of each channel and apply linear1's TCN columns.
    wh = jnp.zeros((c_f * L, O + 2), jnp.float32)
    wh = wh.at[jnp.arange(c_f) * L + (L - 1), :O].set(lw_h.T)
    # wclk: TimePassing rotation, then [linear1 clock columns | identity passthrough].
    ang = 2.0 * math.pi * dt_sec / (24 * 60 * 60)
    ca, sa = math.cos(ang), math.sin(ang)
    rot = jnp.array([[ca, sa], [-sa, ca]], jnp.float32)      # [cos, sin] @ rot = rotated
    wclk = rot @ jnp.concatenate([lw_y.T, jnp.eye(2, dtype=jnp.float32)], axis=1)
    bout = jnp.concatenate([lb, jnp.zeros((2,), jnp.float32)]).reshape(1, O + 2)
    flat += [wh, wclk, bout]
    return {"flat": flat, "has_down": tuple(has_down), "cos_a": ca, "sin_a": sa,
            "output_size": O, "seq_len": L}


# ----------------------------------------------------------------------------- model

def low_resolution_tcn_forward(x, fused):
    """x: (B, C, L) float32 -> (B, output_size + 2, 1), one fused pallas_call."""
    B, C, L = x.shape
    O = fused["output_size"]
    assert L == fused["seq_len"]
    x_clk = x[:, C - 2:C, L - 1]                      # (B, 2) pre-rotation clock features
    if O > C - 2:
        # Replicate PyTorch's in-place TimePassing write-through; it only matters when
        # the TCN input channels overlap the last two (clock) channels.
        new_cos = x_clk[:, 0] * fused["cos_a"] - x_clk[:, 1] * fused["sin_a"]
        new_sin = x_clk[:, 0] * fused["sin_a"] + x_clk[:, 1] * fused["cos_a"]
        x = x.at[:, -2, -1].set(new_cos).at[:, -1, -1].set(new_sin)
    x_tcn = x[:, :O, :].reshape(B, O * L)             # time-flattened TCN input
    inputs = [x_tcn, x_clk] + list(fused["flat"])
    out2d = pl.pallas_call(
        _make_fused_kernel(fused["has_down"]),
        out_shape=jax.ShapeDtypeStruct((B, O + 2), jnp.float32),
        in_specs=[pl.BlockSpec(memory_space=pltpu.MemorySpace.VMEM)] * len(inputs),
        out_specs=pl.BlockSpec(memory_space=pltpu.MemorySpace.VMEM),
    )(*inputs)
    return out2d[:, :, None]                          # (B, O+2, 1)


# ----------------------------------------------------------------------------- params

def init_params(key, output_size, num_channels, kernel_size):
    """Deterministic synthetic weights matching the PyTorch module's shapes.

    conv weights ~ N(0, 0.01) (TCN init), linear1 weight ~ N(0, 0.1) (init_weights).
    weight_norm is a reparameterization only; effective weights are sampled directly.
    """
    params = {"blocks": []}
    in_ch = output_size
    for out_ch in num_channels:
        key, k1, k2, k3, k4, k5, k6 = jax.random.split(key, 7)
        blk = {
            "w1": 0.01 * jax.random.normal(k1, (out_ch, in_ch, kernel_size), jnp.float32),
            "b1": 0.01 * jax.random.normal(k2, (out_ch,), jnp.float32),
            "w2": 0.01 * jax.random.normal(k3, (out_ch, out_ch, kernel_size), jnp.float32),
            "b2": 0.01 * jax.random.normal(k4, (out_ch,), jnp.float32),
        }
        if in_ch != out_ch:
            blk["wd"] = 0.01 * jax.random.normal(k5, (out_ch, in_ch, 1), jnp.float32)
            blk["bd"] = 0.01 * jax.random.normal(k6, (out_ch,), jnp.float32)
        else:
            blk["wd"] = None
            blk["bd"] = None
        params["blocks"].append(blk)
        in_ch = out_ch
    key, kw, kb = jax.random.split(key, 3)
    feat = num_channels[-1] + 2
    params["lin_w"] = 0.1 * jax.random.normal(kw, (output_size, feat), jnp.float32)
    params["lin_b"] = 0.01 * jax.random.normal(kb, (output_size,), jnp.float32)
    return params


# ----------------------------------------------------------------------------- reference

def _reference_causal_conv(x, w, b, dilation):
    c_out, c_in, K = w.shape
    B, _, L = x.shape
    pad = (K - 1) * dilation
    xp = jnp.pad(x, ((0, 0), (0, 0), (pad, 0)))
    out = jnp.zeros((B, c_out, L), jnp.float32)
    for j in range(K):
        out = out + jnp.einsum("oc,bcl->bol", w[:, :, j],
                               xp[:, :, j * dilation:j * dilation + L])
    return out + b[None, :, None]


def _reference_forward(x, params, *, output_size, dt_sec):
    """Pure-JAX transcription of the PyTorch module (eval mode)."""
    ang = 2.0 * math.pi * dt_sec / (24 * 60 * 60)
    cos_t, sin_t = x[:, -2, -1], x[:, -1, -1]
    new_cos = cos_t * math.cos(ang) - sin_t * math.sin(ang)
    new_sin = cos_t * math.sin(ang) + sin_t * math.cos(ang)
    y = jnp.stack([new_cos, new_sin], axis=1)                 # (B, 2)
    x = x.at[:, -2, -1].set(new_cos).at[:, -1, -1].set(new_sin)
    h = x[:, :output_size, :]
    for i, blk in enumerate(params["blocks"]):
        d = 2 ** i
        h1 = jnp.maximum(_reference_causal_conv(h, blk["w1"], blk["b1"], d), 0.0)
        h2 = jnp.maximum(_reference_causal_conv(h1, blk["w2"], blk["b2"], d), 0.0)
        res = (_reference_causal_conv(h, blk["wd"], blk["bd"], 1)
               if blk["wd"] is not None else h)
        h = jnp.maximum(h2 + res, 0.0)
    feat = jnp.concatenate([h[:, :, -1], y], axis=1)          # (B, c_f + 2)
    lin = feat @ params["lin_w"].T + params["lin_b"]          # (B, O)
    return jnp.concatenate([lin, y], axis=1)[:, :, None]      # (B, O+2, 1)


# ----------------------------------------------------------------------------- main

if __name__ == "__main__":
    key = jax.random.PRNGKey(0)
    kx, kt, kp = jax.random.split(key, 3)

    # small shapes consistent with the module
    B, C, L = 2, 4, 16            # batch, input channels, seq_length
    output_size = 2               # TCN consumes the first `output_size` channels
    num_channels = [8, 8]
    kernel_size = 3
    dt_sec = 900.0                # dt = 15 minutes

    x = jax.random.normal(kx, (B, C, L), jnp.float32)
    # make the last two channels look like (cos, sin) time-of-day features
    phase = 2.0 * math.pi * jax.random.uniform(kt, (B, L), jnp.float32)
    x = x.at[:, -2, :].set(jnp.cos(phase)).at[:, -1, :].set(jnp.sin(phase))

    params = init_params(kp, output_size, num_channels, kernel_size)
    fused = prepare_fused_params(params, output_size=output_size, seq_len=L, dt_sec=dt_sec)

    forward = jax.jit(functools.partial(low_resolution_tcn_forward, fused=fused))
    out = jax.block_until_ready(forward(x))
    assert out.shape == (B, output_size + 2, 1), out.shape

    # correctness check against a pure-JAX reference of the PyTorch module
    ref = jax.block_until_ready(
        _reference_forward(x, params, output_size=output_size, dt_sec=dt_sec))
    np.testing.assert_allclose(np.asarray(out), np.asarray(ref), rtol=2e-2, atol=5e-3)

    print("KERNEL_OK")
</pallas_src>

<mosaic_0001>
module attributes {stable_mosaic.version = 11 : i64} {
  func.func @kernel(%arg0: memref<2x32xf32, #tpu.memory_space<vmem>>, %arg1: memref<2x2xf32, #tpu.memory_space<vmem>>, %arg2: memref<32x128xf32, #tpu.memory_space<vmem>>, %arg3: memref<1x128xf32, #tpu.memory_space<vmem>>, %arg4: memref<128x128xf32, #tpu.memory_space<vmem>>, %arg5: memref<1x128xf32, #tpu.memory_space<vmem>>, %arg6: memref<32x128xf32, #tpu.memory_space<vmem>>, %arg7: memref<1x128xf32, #tpu.memory_space<vmem>>, %arg8: memref<128x128xf32, #tpu.memory_space<vmem>>, %arg9: memref<1x128xf32, #tpu.memory_space<vmem>>, %arg10: memref<128x128xf32, #tpu.memory_space<vmem>>, %arg11: memref<1x128xf32, #tpu.memory_space<vmem>>, %arg12: memref<128x4xf32, #tpu.memory_space<vmem>>, %arg13: memref<2x4xf32, #tpu.memory_space<vmem>>, %arg14: memref<1x4xf32, #tpu.memory_space<vmem>>, %arg15: memref<2x4xf32, #tpu.memory_space<vmem>>) attributes {dimension_semantics = [], scalar_prefetch = 0 : i64, scratch_operands = 0 : i64, tpu.core_type = #tpu.core_type<tc>} {
    %c0 = arith.constant 0 : index
    %c0_0 = arith.constant 0 : index
    %0 = vector.load %arg0[%c0, %c0_0] : memref<2x32xf32, #tpu.memory_space<vmem>>, vector<2x32xf32>
    %c0_1 = arith.constant 0 : index
    %c0_2 = arith.constant 0 : index
    %1 = vector.load %arg1[%c0_1, %c0_2] : memref<2x2xf32, #tpu.memory_space<vmem>>, vector<2x2xf32>
    %c0_3 = arith.constant 0 : index
    %c0_4 = arith.constant 0 : index
    %2 = vector.load %arg2[%c0_3, %c0_4] : memref<32x128xf32, #tpu.memory_space<vmem>>, vector<32x128xf32>
    %cst = arith.constant dense<0.000000e+00> : vector<2x128xf32>
    %3 = tpu.matmul %0, %2, %cst {dimension_numbers = #tpu.dot_dimension_numbers<[1], [0], [0], [1], [0, 0, 1, 1], [], []>} : vector<2x32xf32>, vector<32x128xf32>, vector<2x128xf32> -> vector<2x128xf32>
    %c0_5 = arith.constant 0 : index
    %c0_6 = arith.constant 0 : index
    %4 = vector.load %arg3[%c0_5, %c0_6] : memref<1x128xf32, #tpu.memory_space<vmem>>, vector<1x128xf32>
    %5 = vector.broadcast %4 : vector<1x128xf32> to vector<2x128xf32>
    %6 = arith.addf %3, %5 : vector<2x128xf32>
    %cst_7 = arith.constant 0.000000e+00 : f32
    %7 = vector.broadcast %cst_7 : f32 to vector<2x128xf32>
    %8 = arith.maximumf %6, %7 : vector<2x128xf32>
    %c0_8 = arith.constant 0 : index
    %c0_9 = arith.constant 0 : index
    %9 = vector.load %arg4[%c0_8, %c0_9] : memref<128x128xf32, #tpu.memory_space<vmem>>, vector<128x128xf32>
    %cst_10 = arith.constant dense<0.000000e+00> : vector<2x128xf32>
    %10 = tpu.matmul %8, %9, %cst_10 {dimension_numbers = #tpu.dot_dimension_numbers<[1], [0], [0], [1], [0, 0, 1, 1], [], []>} : vector<2x128xf32>, vector<128x128xf32>, vector<2x128xf32> -> vector<2x128xf32>
    %c0_11 = arith.constant 0 : index
    %c0_12 = arith.constant 0 : index
    %11 = vector.load %arg5[%c0_11, %c0_12] : memref<1x128xf32, #tpu.memory_space<vmem>>, vector<1x128xf32>
    %12 = vector.broadcast %11 : vector<1x128xf32> to vector<2x128xf32>
    %13 = arith.addf %10, %12 : vector<2x128xf32>
    %cst_13 = arith.constant 0.000000e+00 : f32
    %14 = vector.broadcast %cst_13 : f32 to vector<2x128xf32>
    %15 = arith.maximumf %13, %14 : vector<2x128xf32>
    %c0_14 = arith.constant 0 : index
    %c0_15 = arith.constant 0 : index
    %16 = vector.load %arg6[%c0_14, %c0_15] : memref<32x128xf32, #tpu.memory_space<vmem>>, vector<32x128xf32>
    %cst_16 = arith.constant dense<0.000000e+00> : vector<2x128xf32>
    %17 = tpu.matmul %0, %16, %cst_16 {dimension_numbers = #tpu.dot_dimension_numbers<[1], [0], [0], [1], [0, 0, 1, 1], [], []>} : vector<2x32xf32>, vector<32x128xf32>, vector<2x128xf32> -> vector<2x128xf32>
    %c0_17 = arith.constant 0 : index
    %c0_18 = arith.constant 0 : index
    %18 = vector.load %arg7[%c0_17, %c0_18] : memref<1x128xf32, #tpu.memory_space<vmem>>, vector<1x128xf32>
    %19 = vector.broadcast %18 : vector<1x128xf32> to vector<2x128xf32>
    %20 = arith.addf %17, %19 : vector<2x128xf32>
    %21 = arith.addf %15, %20 : vector<2x128xf32>
    %cst_19 = arith.constant 0.000000e+00 : f32
    %22 = vector.broadcast %cst_19 : f32 to vector<2x128xf32>
    %23 = arith.maximumf %21, %22 : vector<2x128xf32>
    %c0_20 = arith.constant 0 : index
    %c0_21 = arith.constant 0 : index
    %24 = vector.load %arg8[%c0_20, %c0_21] : memref<128x128xf32, #tpu.memory_space<vmem>>, vector<128x128xf32>
    %cst_22 = arith.constant dense<0.000000e+00> : vector<2x128xf32>
    %25 = tpu.matmul %23, %24, %cst_22 {dimension_numbers = #tpu.dot_dimension_numbers<[1], [0], [0], [1], [0, 0, 1, 1], [], []>} : vector<2x128xf32>, vector<128x128xf32>, vector<2x128xf32> -> vector<2x128xf32>
    %c0_23 = arith.constant 0 : index
    %c0_24 = arith.constant 0 : index
    %26 = vector.load %arg9[%c0_23, %c0_24] : memref<1x128xf32, #tpu.memory_space<vmem>>, vector<1x128xf32>
    %27 = vector.broadcast %26 : vector<1x128xf32> to vector<2x128xf32>
    %28 = arith.addf %25, %27 : vector<2x128xf32>
    %cst_25 = arith.constant 0.000000e+00 : f32
    %29 = vector.broadcast %cst_25 : f32 to vector<2x128xf32>
    %30 = arith.maximumf %28, %29 : vector<2x128xf32>
    %c0_26 = arith.constant 0 : index
    %c0_27 = arith.constant 0 : index
    %31 = vector.load %arg10[%c0_26, %c0_27] : memref<128x128xf32, #tpu.memory_space<vmem>>, vector<128x128xf32>
    %cst_28 = arith.constant dense<0.000000e+00> : vector<2x128xf32>
    %32 = tpu.matmul %30, %31, %cst_28 {dimension_numbers = #tpu.dot_dimension_numbers<[1], [0], [0], [1], [0, 0, 1, 1], [], []>} : vector<2x128xf32>, vector<128x128xf32>, vector<2x128xf32> -> vector<2x128xf32>
    %c0_29 = arith.constant 0 : index
    %c0_30 = arith.constant 0 : index
    %33 = vector.load %arg11[%c0_29, %c0_30] : memref<1x128xf32, #tpu.memory_space<vmem>>, vector<1x128xf32>
    %34 = vector.broadcast %33 : vector<1x128xf32> to vector<2x128xf32>
    %35 = arith.addf %32, %34 : vector<2x128xf32>
    %cst_31 = arith.constant 0.000000e+00 : f32
    %36 = vector.broadcast %cst_31 : f32 to vector<2x128xf32>
    %37 = arith.maximumf %35, %36 : vector<2x128xf32>
    %38 = arith.addf %37, %23 : vector<2x128xf32>
    %cst_32 = arith.constant 0.000000e+00 : f32
    %39 = vector.broadcast %cst_32 : f32 to vector<2x128xf32>
    %40 = arith.maximumf %38, %39 : vector<2x128xf32>
    %c0_33 = arith.constant 0 : index
    %c0_34 = arith.constant 0 : index
    %41 = vector.load %arg12[%c0_33, %c0_34] : memref<128x4xf32, #tpu.memory_space<vmem>>, vector<128x4xf32>
    %c0_35 = arith.constant 0 : index
    %c0_36 = arith.constant 0 : index
    %42 = vector.load %arg13[%c0_35, %c0_36] : memref<2x4xf32, #tpu.memory_space<vmem>>, vector<2x4xf32>
    %c0_37 = arith.constant 0 : index
    %c0_38 = arith.constant 0 : index
    %43 = vector.load %arg14[%c0_37, %c0_38] : memref<1x4xf32, #tpu.memory_space<vmem>>, vector<1x4xf32>
    %cst_39 = arith.constant dense<0.000000e+00> : vector<2x4xf32>
    %44 = tpu.matmul %40, %41, %cst_39 {dimension_numbers = #tpu.dot_dimension_numbers<[1], [0], [0], [1], [0, 0, 1, 1], [], []>} : vector<2x128xf32>, vector<128x4xf32>, vector<2x4xf32> -> vector<2x4xf32>
    %45 = vector.extract_strided_slice %1 {offsets = [0, 0], sizes = [2, 1], strides = [1, 1]} : vector<2x2xf32> to vector<2x1xf32>
    %46 = vector.extract_strided_slice %42 {offsets = [0, 0], sizes = [1, 4], strides = [1, 1]} : vector<2x4xf32> to vector<1x4xf32>
    %47 = vector.broadcast %45 : vector<2x1xf32> to vector<2x4xf32>
    %48 = vector.broadcast %46 : vector<1x4xf32> to vector<2x4xf32>
    %49 = arith.mulf %47, %48 : vector<2x4xf32>
    %50 = arith.addf %44, %49 : vector<2x4xf32>
    %51 = vector.extract_strided_slice %1 {offsets = [0, 1], sizes = [2, 1], strides = [1, 1]} : vector<2x2xf32> to vector<2x1xf32>
    %52 = vector.extract_strided_slice %42 {offsets = [1, 0], sizes = [1, 4], strides = [1, 1]} : vector<2x4xf32> to vector<1x4xf32>
    %53 = vector.broadcast %51 : vector<2x1xf32> to vector<2x4xf32>
    %54 = vector.broadcast %52 : vector<1x4xf32> to vector<2x4xf32>
    %55 = arith.mulf %53, %54 : vector<2x4xf32>
    %56 = arith.addf %50, %55 : vector<2x4xf32>
    %57 = vector.broadcast %43 : vector<1x4xf32> to vector<2x4xf32>
    %58 = arith.addf %56, %57 : vector<2x4xf32>
    %c0_40 = arith.constant 0 : index
    %c0_41 = arith.constant 0 : index
    %59 = vector.load %arg15[%c0_40, %c0_41] : memref<2x4xf32, #tpu.memory_space<vmem>>, vector<2x4xf32>
    tpu.vector_store %arg15[%c0_40, %c0_41], %58 {strides = array<i32>} : memref<2x4xf32, #tpu.memory_space<vmem>>, vector<2x4xf32>,
    return
  }
}

</mosaic_0001>

<llo_original>
// kernel: low_resolution_tcn_forward.1
$region0: #{low_resolution_tcn_forward.1}
  #allocation0 [shape = 'u32[]', space=smem, size = 0x4, offset = 0x4, fixed_abs, tag = 'smem constant byte address 0x4 - core index']
  #allocation1 [shape = 'u32[144,128]{1,0:T(1,128)}', space=vmem, size = 0x12000, scoped, tag = 'internal scratch']
  %s0 = inlined_call_operand.vmem [shape: f32[2,32], index: 0, kind: input, shape index: {}]
  %s1 = inlined_call_operand.vmem [shape: f32[2,2], index: 1, kind: input, shape index: {}]
  %s2 = inlined_call_operand.vmem [shape: f32[32,128], index: 2, kind: input, shape index: {}]
  %s3 = inlined_call_operand.vmem [shape: f32[1,128], index: 3, kind: input, shape index: {}]
  %s4 = inlined_call_operand.hbm [shape: f32[128,128], index: 4, kind: input, shape index: {}]
  %s5 = inlined_call_operand.vmem [shape: f32[1,128], index: 5, kind: input, shape index: {}]
  %s6 = inlined_call_operand.hbm [shape: f32[32,128], index: 6, kind: input, shape index: {}]
  %s7 = inlined_call_operand.vmem [shape: f32[1,128], index: 7, kind: input, shape index: {}]
  %s8 = inlined_call_operand.hbm [shape: f32[128,128], index: 8, kind: input, shape index: {}]
  %s9 = inlined_call_operand.vmem [shape: f32[1,128], index: 9, kind: input, shape index: {}]
  %s10 = inlined_call_operand.hbm [shape: f32[128,128], index: 10, kind: input, shape index: {}]
  %s11 = inlined_call_operand.vmem [shape: f32[1,128], index: 11, kind: input, shape index: {}]
  %s12 = inlined_call_operand.hbm [shape: f32[128,4], index: 12, kind: input, shape index: {}]
  %s13 = inlined_call_operand.vmem [shape: f32[2,4], index: 13, kind: input, shape index: {}]
  %s14 = inlined_call_operand.vmem [shape: f32[1,4], index: 14, kind: input, shape index: {}]
  %s15 = inlined_call_operand.hbm [shape: f32[2,4], index: 15, kind: output, shape index: {}]
  %s16 = sld [smem:[#allocation0]]
  $region90: #{low_resolution_tcn_forward.1} parent=0
    _
  %s18 = ssub.s32 1, %s16
  %s19 = scalar_select 0, %s18, %s16
  $region1: #{low_resolution_tcn_forward.1} parent=0
    #allocation2 [shape = 'u8[65536]{0}', space=vmem, size = 0x10000, scoped, tag = 'input window, operand 4, single buffered']
    #allocation3 [shape = 's32[1]{0}', space=sflag, size = 0x4, scoped, tag = 'scoped memory for low_resolution_tcn_forward.1']
    #allocation4 [shape = 's32[1]{0}', space=sflag, size = 0x4, scoped, tag = 'scoped memory for low_resolution_tcn_forward.1']
    #allocation5 [shape = 'u8[16384]{0}', space=vmem, size = 0x4000, scoped, tag = 'input window, operand 6, single buffered']
    #allocation6 [shape = 's32[1]{0}', space=sflag, size = 0x4, scoped, tag = 'scoped memory for low_resolution_tcn_forward.1']
    #allocation7 [shape = 'u8[65536]{0}', space=vmem, size = 0x10000, scoped, tag = 'input window, operand 8, single buffered']
    #allocation8 [shape = 'u8[65536]{0}', space=vmem, size = 0x10000, scoped, tag = 'input window, operand 10, single buffered']
    #allocation9 [shape = 's32[1]{0}', space=sflag, size = 0x4, scoped, tag = 'scoped memory for low_resolution_tcn_forward.1']
    #allocation10 [shape = 'u8[65536]{0}', space=vmem, size = 0x10000, scoped, tag = 'input window, operand 12, single buffered']
    #allocation11 [shape = 'u8[1024]{0}', space=vmem, size = 0x400, scoped, tag = 'output window, operand 0, single buffered']
    %20 = vsyncpa [#allocation3], 0
    %21 = vsyncpa [#allocation6], 0
    %22 = vsyncpa [#allocation9], 0
    %23 = vsyncpa [#allocation4], 0
    // Predicated region
    $region2: #{low_resolution_tcn_forward.1} parent=1 // pred_check
      _
    $region3: #{low_resolution_tcn_forward.1} parent=1 // pred_check_branch
      %25 = sbr.rel (0) target = $region5
    $region4: #{low_resolution_tcn_forward.1} parent=1 // pred_region
      _
    $region5: #{low_resolution_tcn_forward.1} parent=1 // pred_fallthru
      _
    // Predicated region
    $region6: #{low_resolution_tcn_forward.1} parent=1 // pred_check
      _
    $region7: #{low_resolution_tcn_forward.1} parent=1 // pred_check_branch
      %27 = sbr.rel (0) target = $region9
    $region8: #{low_resolution_tcn_forward.1} parent=1 // pred_region
      _
    $region9: #{low_resolution_tcn_forward.1} parent=1 // pred_fallthru
      _
    // Predicated region
    $region10: #{low_resolution_tcn_forward.1} parent=1 // pred_check
      _
    $region11: #{low_resolution_tcn_forward.1} parent=1 // pred_check_branch
      %29 = sbr.rel (0) target = $region13
    $region12: #{low_resolution_tcn_forward.1} parent=1 // pred_region
      _
    $region13: #{low_resolution_tcn_forward.1} parent=1 // pred_fallthru
      _
    // Predicated region
    $region14: #{low_resolution_tcn_forward.1} parent=1 // pred_check
      _
    $region15: #{low_resolution_tcn_forward.1} parent=1 // pred_check_branch
      %31 = sbr.rel (0) target = $region17
    $region16: #{low_resolution_tcn_forward.1} parent=1 // pred_region
      _
    $region17: #{low_resolution_tcn_forward.1} parent=1 // pred_fallthru
      _
    // Predicated region
    $region18: #{low_resolution_tcn_forward.1} parent=1 // pred_check
      _
    $region19: #{low_resolution_tcn_forward.1} parent=1 // pred_check_branch
      %33 = sbr.rel (0) target = $region21
    $region20: #{low_resolution_tcn_forward.1} parent=1 // pred_region
      %s35 = ssub.s32 2048, 2048
      %36 = vsyncadd [#allocation3], %s35
      %s37 = sshll.u32 [#allocation2], 4
      %s38 = int_to_ptr.vmem [resolvable:$true] %s37
      %43 = dma.hbm_to_vmem [thread:$0]  %s4, 2048, %s38, [#allocation3], 128, 128, 8
    $region21: #{low_resolution_tcn_forward.1} parent=1 // pred_fallthru
      _
    // Predicated region
    $region22: #{low_resolution_tcn_forward.1} parent=1 // pred_check
      _
    $region23: #{low_resolution_tcn_forward.1} parent=1 // pred_check_branch
      %45 = sbr.rel (0) target = $region25
    $region24: #{low_resolution_tcn_forward.1} parent=1 // pred_region
      _
    $region25: #{low_resolution_tcn_forward.1} parent=1 // pred_fallthru
      _
    // Predicated region
    $region26: #{low_resolution_tcn_forward.1} parent=1 // pred_check
      _
    $region27: #{low_resolution_tcn_forward.1} parent=1 // pred_check_branch
      %47 = sbr.rel (0) target = $region29
    $region28: #{low_resolution_tcn_forward.1} parent=1 // pred_region
      %s49 = ssub.s32 512, 512
      %50 = vsyncadd [#allocation6], %s49
      %s51 = sshll.u32 [#allocation5], 4
      %s52 = int_to_ptr.vmem [resolvable:$true] %s51
      %57 = dma.hbm_to_vmem [thread:$0]  %s6, 512, %s52, [#allocation6], 128, 128, 8
    $region29: #{low_resolution_tcn_forward.1} parent=1 // pred_fallthru
      _
    // Predicated region
    $region30: #{low_resolution_tcn_forward.1} parent=1 // pred_check
      _
    $region31: #{low_resolution_tcn_forward.1} parent=1 // pred_check_branch
      %59 = sbr.rel (0) target = $region33
    $region32: #{low_resolution_tcn_forward.1} parent=1 // pred_region
      _
    $region33: #{low_resolution_tcn_forward.1} parent=1 // pred_fallthru
      _
    // Predicated region
    $region34: #{low_resolution_tcn_forward.1} parent=1 // pred_check
      _
    $region35: #{low_resolution_tcn_forward.1} parent=1 // pred_check_branch
      %61 = sbr.rel (0) target = $region37
    $region36: #{low_resolution_tcn_forward.1} parent=1 // pred_region
      %s63 = ssub.s32 2048, 2048
      %64 = vsyncadd [#allocation6], %s63
      %s65 = sshll.u32 [#allocation7], 4
      %s66 = int_to_ptr.vmem [resolvable:$true] %s65
      %71 = dma.hbm_to_vmem [thread:$0]  %s8, 2048, %s66, [#allocation6], 128, 128, 8
    $region37: #{low_resolution_tcn_forward.1} parent=1 // pred_fallthru
      _
    // Predicated region
    $region38: #{low_resolution_tcn_forward.1} parent=1 // pred_check
      _
    $region39: #{low_resolution_tcn_forward.1} parent=1 // pred_check_branch
      %73 = sbr.rel (0) target = $region41
    $region40: #{low_resolution_tcn_forward.1} parent=1 // pred_region
      _
    $region41: #{low_resolution_tcn_forward.1} parent=1 // pred_fallthru
      _
    // Predicated region
    $region42: #{low_resolution_tcn_forward.1} parent=1 // pred_check
      _
    $region43: #{low_resolution_tcn_forward.1} parent=1 // pred_check_branch
      %75 = sbr.rel (0) target = $region45
    $region44: #{low_resolution_tcn_forward.1} parent=1 // pred_region
      %s77 = ssub.s32 2048, 2048
      %78 = vsyncadd [#allocation9], %s77
      %s79 = sshll.u32 [#allocation8], 4
      %s80 = int_to_ptr.vmem [resolvable:$true] %s79
      %85 = dma.hbm_to_vmem [thread:$0]  %s10, 2048, %s80, [#allocation9], 128, 128, 8
    $region45: #{low_resolution_tcn_forward.1} parent=1 // pred_fallthru
      _
    // Predicated region
    $region46: #{low_resolution_tcn_forward.1} parent=1 // pred_check
      _
    $region47: #{low_resolution_tcn_forward.1} parent=1 // pred_check_branch
      %87 = sbr.rel (0) target = $region49
    $region48: #{low_resolution_tcn_forward.1} parent=1 // pred_region
      _
    $region49: #{low_resolution_tcn_forward.1} parent=1 // pred_fallthru
      _
    // Predicated region
    $region50: #{low_resolution_tcn_forward.1} parent=1 // pred_check
      _
    $region51: #{low_resolution_tcn_forward.1} parent=1 // pred_check_branch
      %89 = sbr.rel (0) target = $region53
    $region52: #{low_resolution_tcn_forward.1} parent=1 // pred_region
      %s91 = ssub.s32 2048, 2048
      %92 = vsyncadd [#allocation9], %s91
      %s93 = sshll.u32 [#allocation10], 4
      %s94 = int_to_ptr.vmem [resolvable:$true] %s93
      %99 = dma.hbm_to_vmem [thread:$0]  %s12, 2048, %s94, [#allocation9], 128, 128, 8
    $region53: #{low_resolution_tcn_forward.1} parent=1 // pred_fallthru
      _
    // Predicated region
    $region54: #{low_resolution_tcn_forward.1} parent=1 // pred_check
      _
    $region55: #{low_resolution_tcn_forward.1} parent=1 // pred_check_branch
      %101 = sbr.rel (0) target = $region57
    $region56: #{low_resolution_tcn_forward.1} parent=1 // pred_region
      _
    $region57: #{low_resolution_tcn_forward.1} parent=1 // pred_fallthru
      _
    // Predicated region
    $region58: #{low_resolution_tcn_forward.1} parent=1 // pred_check
      _
    $region59: #{low_resolution_tcn_forward.1} parent=1 // pred_check_branch
      %103 = sbr.rel (0) target = $region61
    $region60: #{low_resolution_tcn_forward.1} parent=1 // pred_region
      _
    $region61: #{low_resolution_tcn_forward.1} parent=1 // pred_fallthru
      _
    // Predicated region
    $region62: #{low_resolution_tcn_forward.1} parent=1 // pred_check
      _
    $region63: #{low_resolution_tcn_forward.1} parent=1 // pred_check_branch
      %105 = sbr.rel (0) target = $region65
    $region64: #{low_resolution_tcn_forward.1} parent=1 // pred_region
      %106 = dma.done [#allocation3], 2048
    $region65: #{low_resolution_tcn_forward.1} parent=1 // pred_fallthru
      _
    // Predicated region
    $region66: #{low_resolution_tcn_forward.1} parent=1 // pred_check
      _
    $region67: #{low_resolution_tcn_forward.1} parent=1 // pred_check_branch
      %108 = sbr.rel (0) target = $region69
    $region68: #{low_resolution_tcn_forward.1} parent=1 // pred_region
      %109 = dma.done [#allocation6], 512
    $region69: #{low_resolution_tcn_forward.1} parent=1 // pred_fallthru
      _
    // Predicated region
    $region70: #{low_resolution_tcn_forward.1} parent=1 // pred_check
      _
    $region71: #{low_resolution_tcn_forward.1} parent=1 // pred_check_branch
      %111 = sbr.rel (0) target = $region73
    $region72: #{low_resolution_tcn_forward.1} parent=1 // pred_region
      %112 = dma.done [#allocation6], 2048
    $region73: #{low_resolution_tcn_forward.1} parent=1 // pred_fallthru
      _
    // Predicated region
    $region74: #{low_resolution_tcn_forward.1} parent=1 // pred_check
      _
    $region75: #{low_resolution_tcn_forward.1} parent=1 // pred_check_branch
      %114 = sbr.rel (0) target = $region77
    $region76: #{low_resolution_tcn_forward.1} parent=1 // pred_region
      %115 = dma.done [#allocation9], 2048
    $region77: #{low_resolution_tcn_forward.1} parent=1 // pred_fallthru
      _
    // Predicated region
    $region78: #{low_resolution_tcn_forward.1} parent=1 // pred_check
      _
    $region79: #{low_resolution_tcn_forward.1} parent=1 // pred_check_branch
      %117 = sbr.rel (0) target = $region81
    $region80: #{low_resolution_tcn_forward.1} parent=1 // pred_region
      %118 = dma.done [#allocation9], 2048
    $region81: #{low_resolution_tcn_forward.1} parent=1 // pred_fallthru
      _
    %v119 = vld [vmem:[%s0] sm:$0x3]
    %v120 = vld [vmem:[%s1] sm:$0x3]
    %v121 = vld [vmem:[%s2] sm:$0xff]
    %v122 = vld [vmem:[%s2 + $0x8] sm:$0xff]
    %v123 = vld [vmem:[%s2 + $0x10] sm:$0xff]
    %v124 = vld [vmem:[%s2 + $0x18] sm:$0xff]
    %v125 = vld [vmem:[%s3] sm:$0x1]
    %v127 = vlaneseq
    %v128 = vshrl.u32 %v127, 7
    %v129 = vsub.s32 0, %v128
    %v130 = vrot.slane %v125, %v129
    %vm132 = vcmask 261120
    %v134 = vsel %vm132, %v119, 0
    %136 = vmatprep.subr.mxu0 0.0
    %137 = vmatpush1.msra.mxu0 0.0
    %138 = vmatprep.subr.mxu0 0.0
    %139 = vmatpush1.msra.mxu0 0.0
    %140 = vmatprep.subr.mxu0 0.0
    %141 = vmatpush1.msra.mxu0 0.0
    %142 = vmatprep.subr.mxu0 0.0
    %143 = vmatpush1.msra.mxu0 0.0
    %144 = vmatprep.subr.mxu0 0.0
    %145 = vmatpush1.msra.mxu0 0.0
    %146 = vmatprep.subr.mxu0 0.0
    %147 = vmatpush1.msra.mxu0 0.0
    %148 = vmatprep.subr.mxu0 0.0
    %149 = vmatpush1.msra.mxu0 0.0
    %150 = vmatprep.subr.mxu0 0.0
    %151 = vmatpush1.msra.mxu0 0.0
    %152 = vmatprep.subr.mxu0 0.0
    %153 = vmatpush1.msra.mxu0 0.0
    %154 = vmatprep.subr.mxu0 0.0
    %155 = vmatpush1.msra.mxu0 0.0
    %156 = vmatprep.subr.mxu0 0.0
    %157 = vmatpush1.msra.mxu0 0.0
    %158 = vmatprep.subr.mxu0 0.0
    %159 = vmatpush1.msra.mxu0 0.0
    %160 = vmatprep.subr.mxu0 0.0
    %161 = vmatpush1.msra.mxu0 %v124
    %162 = vmatprep.subr.mxu0 0.0
    %163 = vmatpush1.msra.mxu0 %v123
    %164 = vmatprep.subr.mxu0 0.0
    %165 = vmatpush1.msra.mxu0 %v122
    %166 = vmatprep.subr.mxu0 0.0
    %167 = vmatpush1.msra.mxu0 %v121
    %168 = vmatprep.subr.mxu0 0.0
    %169 = vmatpush2.msra.mxu0 0.0
    %170 = vmatprep.subr.mxu0 0.0
    %171 = vmatpush2.msra.mxu0 0.0
    %172 = vmatprep.subr.mxu0 0.0
    %173 = vmatpush2.msra.mxu0 0.0
    %174 = vmatprep.subr.mxu0 0.0
    %175 = vmatpush2.msra.mxu0 0.0
    %176 = vmatprep.subr.mxu0 0.0
    %177 = vmatpush2.msra.mxu0 0.0
    %178 = vmatprep.subr.mxu0 0.0
    %179 = vmatpush2.msra.mxu0 0.0
    %180 = vmatprep.subr.mxu0 0.0
    %181 = vmatpush2.msra.mxu0 0.0
    %182 = vmatprep.subr.mxu0 0.0
    %183 = vmatpush2.msra.mxu0 0.0
    %184 = vmatprep.subr.mxu0 0.0
    %185 = vmatpush2.msra.mxu0 0.0
    %186 = vmatprep.subr.mxu0 0.0
    %187 = vmatpush2.msra.mxu0 0.0
    %188 = vmatprep.subr.mxu0 0.0
    %189 = vmatpush2.msra.mxu0 0.0
    %190 = vmatprep.subr.mxu0 0.0
    %191 = vmatpush2.msra.mxu0 0.0
    %192 = vmatprep.subr.mxu0 0.0
    %193 = vmatpush2.msra.mxu0 0.0
    %194 = vmatprep.subr.mxu0 0.0
    %195 = vmatpush2.msra.mxu0 0.0
    %196 = vmatprep.subr.mxu0 0.0
    %197 = vmatpush2.msra.mxu0 0.0
    %198 = vmatprep.subr.mxu0 0.0
    %199 = vmatpush2.msra.mxu0 0.0
    %200 = vmatprep.mubr.f32.mxu0 0.0
    %201 = vmatmul.mubr.f32.gmra.mxu0 %v134
    %v202 = vpop.f32.mrf.mxu0
    %v203 = vadd.f32 %v130, %v202
    %v204 = vpop.f32.mrf.mxu0
    %205 = vdwg.mxu0
    %v206 = vmax.f32 %v203, 0.0
    %v207 = vld [vmem:[#allocation2] sm:$0xff]
    %v208 = vld [vmem:[#allocation2 + $0x8] sm:$0xff]
    %v209 = vld [vmem:[#allocation2 + $0x10] sm:$0xff]
    %v210 = vld [vmem:[#allocation2 + $0x18] sm:$0xff]
    %v211 = vld [vmem:[#allocation2 + $0x20] sm:$0xff]
    %v212 = vld [vmem:[#allocation2 + $0x28] sm:$0xff]
    %v213 = vld [vmem:[#allocation2 + $0x30] sm:$0xff]
    %v214 = vld [vmem:[#allocation2 + $0x38] sm:$0xff]
    %v215 = vld [vmem:[#allocation2 + $0x40] sm:$0xff]
    %v216 = vld [vmem:[#allocation2 + $0x48] sm:$0xff]
    %v217 = vld [vmem:[#allocation2 + $0x50] sm:$0xff]
    %v218 = vld [vmem:[#allocation2 + $0x58] sm:$0xff]
    %v219 = vld [vmem:[#allocation2 + $0x60] sm:$0xff]
    %v220 = vld [vmem:[#allocation2 + $0x68] sm:$0xff]
    %v221 = vld [vmem:[#allocation2 + $0x70] sm:$0xff]
    %v222 = vld [vmem:[#allocation2 + $0x78] sm:$0xff]
    %v223 = vld [vmem:[%s5] sm:$0x1]
    %v225 = vlaneseq
    %v226 = vshrl.u32 %v225, 7
    %v227 = vsub.s32 0, %v226
    %v228 = vrot.slane %v223, %v227
    %230 = vmatprep.subr.mxu0 0.0
    %231 = vmatpush1.msra.mxu0 %v222
    %232 = vmatprep.subr.mxu0 0.0
    %233 = vmatpush1.msra.mxu0 %v221
    %234 = vmatprep.subr.mxu0 0.0
    %235 = vmatpush1.msra.mxu0 %v220
    %236 = vmatprep.subr.mxu0 0.0
    %237 = vmatpush1.msra.mxu0 %v219
    %238 = vmatprep.subr.mxu0 0.0
    %239 = vmatpush1.msra.mxu0 %v218
    %240 = vmatprep.subr.mxu0 0.0
    %241 = vmatpush1.msra.mxu0 %v217
    %242 = vmatprep.subr.mxu0 0.0
    %243 = vmatpush1.msra.mxu0 %v216
    %244 = vmatprep.subr.mxu0 0.0
    %245 = vmatpush1.msra.mxu0 %v215
    %246 = vmatprep.subr.mxu0 0.0
    %247 = vmatpush1.msra.mxu0 %v214
    %248 = vmatprep.subr.mxu0 0.0
    %249 = vmatpush1.msra.mxu0 %v213
    %250 = vmatprep.subr.mxu0 0.0
    %251 = vmatpush1.msra.mxu0 %v212
    %252 = vmatprep.subr.mxu0 0.0
    %253 = vmatpush1.msra.mxu0 %v211
    %254 = vmatprep.subr.mxu0 0.0
    %255 = vmatpush1.msra.mxu0 %v210
    %256 = vmatprep.subr.mxu0 0.0
    %257 = vmatpush1.msra.mxu0 %v209
    %258 = vmatprep.subr.mxu0 0.0
    %259 = vmatpush1.msra.mxu0 %v208
    %260 = vmatprep.subr.mxu0 0.0
    %261 = vmatpush1.msra.mxu0 %v207
    %262 = vmatprep.subr.mxu0 0.0
    %263 = vmatpush2.msra.mxu0 0.0
    %264 = vmatprep.subr.mxu0 0.0
    %265 = vmatpush2.msra.mxu0 0.0
    %266 = vmatprep.subr.mxu0 0.0
    %267 = vmatpush2.msra.mxu0 0.0
    %268 = vmatprep.subr.mxu0 0.0
    %269 = vmatpush2.msra.mxu0 0.0
    %270 = vmatprep.subr.mxu0 0.0
    %271 = vmatpush2.msra.mxu0 0.0
    %272 = vmatprep.subr.mxu0 0.0
    %273 = vmatpush2.msra.mxu0 0.0
    %274 = vmatprep.subr.mxu0 0.0
    %275 = vmatpush2.msra.mxu0 0.0
    %276 = vmatprep.subr.mxu0 0.0
    %277 = vmatpush2.msra.mxu0 0.0
    %278 = vmatprep.subr.mxu0 0.0
    %279 = vmatpush2.msra.mxu0 0.0
    %280 = vmatprep.subr.mxu0 0.0
    %281 = vmatpush2.msra.mxu0 0.0
    %282 = vmatprep.subr.mxu0 0.0
    %283 = vmatpush2.msra.mxu0 0.0
    %284 = vmatprep.subr.mxu0 0.0
    %285 = vmatpush2.msra.mxu0 0.0
    %286 = vmatprep.subr.mxu0 0.0
    %287 = vmatpush2.msra.mxu0 0.0
    %288 = vmatprep.subr.mxu0 0.0
    %289 = vmatpush2.msra.mxu0 0.0
    %290 = vmatprep.subr.mxu0 0.0
    %291 = vmatpush2.msra.mxu0 0.0
    %292 = vmatprep.subr.mxu0 0.0
    %293 = vmatpush2.msra.mxu0 0.0
    %294 = vmatprep.mubr.f32.mxu0 0.0
    %295 = vmatmul.mubr.f32.gmra.mxu0 %v206
    %v296 = vpop.f32.mrf.mxu0
    %v297 = vadd.f32 %v228, %v296
    %v298 = vpop.f32.mrf.mxu0
    %299 = vdwg.mxu0
    %v300 = vmax.f32 %v297, 0.0
    %v301 = vld [vmem:[#allocation5] sm:$0xff]
    %v302 = vld [vmem:[#allocation5 + $0x8] sm:$0xff]
    %v303 = vld [vmem:[#allocation5 + $0x10] sm:$0xff]
    %v304 = vld [vmem:[#allocation5 + $0x18] sm:$0xff]
    %v305 = vld [vmem:[%s7] sm:$0x1]
    %v307 = vlaneseq
    %v308 = vshrl.u32 %v307, 7
    %v309 = vsub.s32 0, %v308
    %v310 = vrot.slane %v305, %v309
    %312 = vmatprep.subr.mxu0 0.0
    %313 = vmatpush1.msra.mxu0 0.0
    %314 = vmatprep.subr.mxu0 0.0
    %315 = vmatpush1.msra.mxu0 0.0
    %316 = vmatprep.subr.mxu0 0.0
    %317 = vmatpush1.msra.mxu0 0.0
    %318 = vmatprep.subr.mxu0 0.0
    %319 = vmatpush1.msra.mxu0 0.0
    %320 = vmatprep.subr.mxu0 0.0
    %321 = vmatpush1.msra.mxu0 0.0
    %322 = vmatprep.subr.mxu0 0.0
    %323 = vmatpush1.msra.mxu0 0.0
    %324 = vmatprep.subr.mxu0 0.0
    %325 = vmatpush1.msra.mxu0 0.0
    %326 = vmatprep.subr.mxu0 0.0
    %327 = vmatpush1.msra.mxu0 0.0
    %328 = vmatprep.subr.mxu0 0.0
    %329 = vmatpush1.msra.mxu0 0.0
    %330 = vmatprep.subr.mxu0 0.0
    %331 = vmatpush1.msra.mxu0 0.0
    %332 = vmatprep.subr.mxu0 0.0
    %333 = vmatpush1.msra.mxu0 0.0
    %334 = vmatprep.subr.mxu0 0.0
    %335 = vmatpush1.msra.mxu0 0.0
    %336 = vmatprep.subr.mxu0 0.0
    %337 = vmatpush1.msra.mxu0 %v304
    %338 = vmatprep.subr.mxu0 0.0
    %339 = vmatpush1.msra.mxu0 %v303
    %340 = vmatprep.subr.mxu0 0.0
    %341 = vmatpush1.msra.mxu0 %v302
    %342 = vmatprep.subr.mxu0 0.0
    %343 = vmatpush1.msra.mxu0 %v301
    %344 = vmatprep.subr.mxu0 0.0
    %345 = vmatpush2.msra.mxu0 0.0
    %346 = vmatprep.subr.mxu0 0.0
    %347 = vmatpush2.msra.mxu0 0.0
    %348 = vmatprep.subr.mxu0 0.0
    %349 = vmatpush2.msra.mxu0 0.0
    %350 = vmatprep.subr.mxu0 0.0
    %351 = vmatpush2.msra.mxu0 0.0
    %352 = vmatprep.subr.mxu0 0.0
    %353 = vmatpush2.msra.mxu0 0.0
    %354 = vmatprep.subr.mxu0 0.0
    %355 = vmatpush2.msra.mxu0 0.0
    %356 = vmatprep.subr.mxu0 0.0
    %357 = vmatpush2.msra.mxu0 0.0
    %358 = vmatprep.subr.mxu0 0.0
    %359 = vmatpush2.msra.mxu0 0.0
    %360 = vmatprep.subr.mxu0 0.0
    %361 = vmatpush2.msra.mxu0 0.0
    %362 = vmatprep.subr.mxu0 0.0
    %363 = vmatpush2.msra.mxu0 0.0
    %364 = vmatprep.subr.mxu0 0.0
    %365 = vmatpush2.msra.mxu0 0.0
    %366 = vmatprep.subr.mxu0 0.0
    %367 = vmatpush2.msra.mxu0 0.0
    %368 = vmatprep.subr.mxu0 0.0
    %369 = vmatpush2.msra.mxu0 0.0
    %370 = vmatprep.subr.mxu0 0.0
    %371 = vmatpush2.msra.mxu0 0.0
    %372 = vmatprep.subr.mxu0 0.0
    %373 = vmatpush2.msra.mxu0 0.0
    %374 = vmatprep.subr.mxu0 0.0
    %375 = vmatpush2.msra.mxu0 0.0
    %376 = vmatprep.mubr.f32.mxu0 0.0
    %377 = vmatmul.mubr.f32.gmra.mxu0 %v134
    %v378 = vpop.f32.mrf.mxu0
    %v379 = vadd.f32 %v310, %v378
    %v380 = vpop.f32.mrf.mxu0
    %381 = vdwg.mxu0
    %v382 = vadd.f32 %v300, %v379
    %v383 = vmax.f32 %v382, 0.0
    %v384 = vld [vmem:[#allocation7] sm:$0xff]
    %v385 = vld [vmem:[#allocation7 + $0x8] sm:$0xff]
    %v386 = vld [vmem:[#allocation7 + $0x10] sm:$0xff]
    %v387 = vld [vmem:[#allocation7 + $0x18] sm:$0xff]
    %v388 = vld [vmem:[#allocation7 + $0x20] sm:$0xff]
    %v389 = vld [vmem:[#allocation7 + $0x28] sm:$0xff]
    %v390 = vld [vmem:[#allocation7 + $0x30] sm:$0xff]
    %v391 = vld [vmem:[#allocation7 + $0x38] sm:$0xff]
    %v392 = vld [vmem:[#allocation7 + $0x40] sm:$0xff]
    %v393 = vld [vmem:[#allocation7 + $0x48] sm:$0xff]
    %v394 = vld [vmem:[#allocation7 + $0x50] sm:$0xff]
    %v395 = vld [vmem:[#allocation7 + $0x58] sm:$0xff]
    %v396 = vld [vmem:[#allocation7 + $0x60] sm:$0xff]
    %v397 = vld [vmem:[#allocation7 + $0x68] sm:$0xff]
    %v398 = vld [vmem:[#allocation7 + $0x70] sm:$0xff]
    %v399 = vld [vmem:[#allocation7 + $0x78] sm:$0xff]
    %v400 = vld [vmem:[%s9] sm:$0x1]
    %v402 = vlaneseq
    %v403 = vshrl.u32 %v402, 7
    %v404 = vsub.s32 0, %v403
    %v405 = vrot.slane %v400, %v404
    %407 = vmatprep.subr.mxu0 0.0
    %408 = vmatpush1.msra.mxu0 %v399
    %409 = vmatprep.subr.mxu0 0.0
    %410 = vmatpush1.msra.mxu0 %v398
    %411 = vmatprep.subr.mxu0 0.0
    %412 = vmatpush1.msra.mxu0 %v397
    %413 = vmatprep.subr.mxu0 0.0
    %414 = vmatpush1.msra.mxu0 %v396
    %415 = vmatprep.subr.mxu0 0.0
    %416 = vmatpush1.msra.mxu0 %v395
    %417 = vmatprep.subr.mxu0 0.0
    %418 = vmatpush1.msra.mxu0 %v394
    %419 = vmatprep.subr.mxu0 0.0
    %420 = vmatpush1.msra.mxu0 %v393
    %421 = vmatprep.subr.mxu0 0.0
    %422 = vmatpush1.msra.mxu0 %v392
    %423 = vmatprep.subr.mxu0 0.0
    %424 = vmatpush1.msra.mxu0 %v391
    %425 = vmatprep.subr.mxu0 0.0
    %426 = vmatpush1.msra.mxu0 %v390
    %427 = vmatprep.subr.mxu0 0.0
    %428 = vmatpush1.msra.mxu0 %v389
    %429 = vmatprep.subr.mxu0 0.0
    %430 = vmatpush1.msra.mxu0 %v388
    %431 = vmatprep.subr.mxu0 0.0
    %432 = vmatpush1.msra.mxu0 %v387
    %433 = vmatprep.subr.mxu0 0.0
    %434 = vmatpush1.msra.mxu0 %v386
    %435 = vmatprep.subr.mxu0 0.0
    %436 = vmatpush1.msra.mxu0 %v385
    %437 = vmatprep.subr.mxu0 0.0
    %438 = vmatpush1.msra.mxu0 %v384
    %439 = vmatprep.subr.mxu0 0.0
    %440 = vmatpush2.msra.mxu0 0.0
    %441 = vmatprep.subr.mxu0 0.0
    %442 = vmatpush2.msra.mxu0 0.0
    %443 = vmatprep.subr.mxu0 0.0
    %444 = vmatpush2.msra.mxu0 0.0
    %445 = vmatprep.subr.mxu0 0.0
    %446 = vmatpush2.msra.mxu0 0.0
    %447 = vmatprep.subr.mxu0 0.0
    %448 = vmatpush2.msra.mxu0 0.0
    %449 = vmatprep.subr.mxu0 0.0
    %450 = vmatpush2.msra.mxu0 0.0
    %451 = vmatprep.subr.mxu0 0.0
    %452 = vmatpush2.msra.mxu0 0.0
    %453 = vmatprep.subr.mxu0 0.0
    %454 = vmatpush2.msra.mxu0 0.0
    %455 = vmatprep.subr.mxu0 0.0
    %456 = vmatpush2.msra.mxu0 0.0
    %457 = vmatprep.subr.mxu0 0.0
    %458 = vmatpush2.msra.mxu0 0.0
    %459 = vmatprep.subr.mxu0 0.0
    %460 = vmatpush2.msra.mxu0 0.0
    %461 = vmatprep.subr.mxu0 0.0
    %462 = vmatpush2.msra.mxu0 0.0
    %463 = vmatprep.subr.mxu0 0.0
    %464 = vmatpush2.msra.mxu0 0.0
    %465 = vmatprep.subr.mxu0 0.0
    %466 = vmatpush2.msra.mxu0 0.0
    %467 = vmatprep.subr.mxu0 0.0
    %468 = vmatpush2.msra.mxu0 0.0
    %469 = vmatprep.subr.mxu0 0.0
    %470 = vmatpush2.msra.mxu0 0.0
    %471 = vmatprep.mubr.f32.mxu0 0.0
    %472 = vmatmul.mubr.f32.gmra.mxu0 %v383
    %v473 = vpop.f32.mrf.mxu0
    %v474 = vadd.f32 %v405, %v473
    %v475 = vpop.f32.mrf.mxu0
    %476 = vdwg.mxu0
    %v477 = vmax.f32 %v474, 0.0
    %v478 = vld [vmem:[#allocation8] sm:$0xff]
    %v479 = vld [vmem:[#allocation8 + $0x8] sm:$0xff]
    %v480 = vld [vmem:[#allocation8 + $0x10] sm:$0xff]
    %v481 = vld [vmem:[#allocation8 + $0x18] sm:$0xff]
    %v482 = vld [vmem:[#allocation8 + $0x20] sm:$0xff]
    %v483 = vld [vmem:[#allocation8 + $0x28] sm:$0xff]
    %v484 = vld [vmem:[#allocation8 + $0x30] sm:$0xff]
    %v485 = vld [vmem:[#allocation8 + $0x38] sm:$0xff]
    %v486 = vld [vmem:[#allocation8 + $0x40] sm:$0xff]
    %v487 = vld [vmem:[#allocation8 + $0x48] sm:$0xff]
    %v488 = vld [vmem:[#allocation8 + $0x50] sm:$0xff]
    %v489 = vld [vmem:[#allocation8 + $0x58] sm:$0xff]
    %v490 = vld [vmem:[#allocation8 + $0x60] sm:$0xff]
    %v491 = vld [vmem:[#allocation8 + $0x68] sm:$0xff]
    %v492 = vld [vmem:[#allocation8 + $0x70] sm:$0xff]
    %v493 = vld [vmem:[#allocation8 + $0x78] sm:$0xff]
    %v494 = vld [vmem:[%s11] sm:$0x1]
    %v496 = vlaneseq
    %v497 = vshrl.u32 %v496, 7
    %v498 = vsub.s32 0, %v497
    %v499 = vrot.slane %v494, %v498
    %501 = vmatprep.subr.mxu0 0.0
    %502 = vmatpush1.msra.mxu0 %v493
    %503 = vmatprep.subr.mxu0 0.0
    %504 = vmatpush1.msra.mxu0 %v492
    %505 = vmatprep.subr.mxu0 0.0
    %506 = vmatpush1.msra.mxu0 %v491
    %507 = vmatprep.subr.mxu0 0.0
    %508 = vmatpush1.msra.mxu0 %v490
    %509 = vmatprep.subr.mxu0 0.0
    %510 = vmatpush1.msra.mxu0 %v489
    %511 = vmatprep.subr.mxu0 0.0
    %512 = vmatpush1.msra.mxu0 %v488
    %513 = vmatprep.subr.mxu0 0.0
    %514 = vmatpush1.msra.mxu0 %v487
    %515 = vmatprep.subr.mxu0 0.0
    %516 = vmatpush1.msra.mxu0 %v486
    %517 = vmatprep.subr.mxu0 0.0
    %518 = vmatpush1.msra.mxu0 %v485
    %519 = vmatprep.subr.mxu0 0.0
    %520 = vmatpush1.msra.mxu0 %v484
    %521 = vmatprep.subr.mxu0 0.0
    %522 = vmatpush1.msra.mxu0 %v483
    %523 = vmatprep.subr.mxu0 0.0
    %524 = vmatpush1.msra.mxu0 %v482
    %525 = vmatprep.subr.mxu0 0.0
    %526 = vmatpush1.msra.mxu0 %v481
    %527 = vmatprep.subr.mxu0 0.0
    %528 = vmatpush1.msra.mxu0 %v480
    %529 = vmatprep.subr.mxu0 0.0
    %530 = vmatpush1.msra.mxu0 %v479
    %531 = vmatprep.subr.mxu0 0.0
    %532 = vmatpush1.msra.mxu0 %v478
    %533 = vmatprep.subr.mxu0 0.0
    %534 = vmatpush2.msra.mxu0 0.0
    %535 = vmatprep.subr.mxu0 0.0
    %536 = vmatpush2.msra.mxu0 0.0
    %537 = vmatprep.subr.mxu0 0.0
    %538 = vmatpush2.msra.mxu0 0.0
    %539 = vmatprep.subr.mxu0 0.0
    %540 = vmatpush2.msra.mxu0 0.0
    %541 = vmatprep.subr.mxu0 0.0
    %542 = vmatpush2.msra.mxu0 0.0
    %543 = vmatprep.subr.mxu0 0.0
    %544 = vmatpush2.msra.mxu0 0.0
    %545 = vmatprep.subr.mxu0 0.0
    %546 = vmatpush2.msra.mxu0 0.0
    %547 = vmatprep.subr.mxu0 0.0
    %548 = vmatpush2.msra.mxu0 0.0
    %549 = vmatprep.subr.mxu0 0.0
    %550 = vmatpush2.msra.mxu0 0.0
    %551 = vmatprep.subr.mxu0 0.0
    %552 = vmatpush2.msra.mxu0 0.0
    %553 = vmatprep.subr.mxu0 0.0
    %554 = vmatpush2.msra.mxu0 0.0
    %555 = vmatprep.subr.mxu0 0.0
    %556 = vmatpush2.msra.mxu0 0.0
    %557 = vmatprep.subr.mxu0 0.0
    %558 = vmatpush2.msra.mxu0 0.0
    %559 = vmatprep.subr.mxu0 0.0
    %560 = vmatpush2.msra.mxu0 0.0
    %561 = vmatprep.subr.mxu0 0.0
    %562 = vmatpush2.msra.mxu0 0.0
    %563 = vmatprep.subr.mxu0 0.0
    %564 = vmatpush2.msra.mxu0 0.0
    %565 = vmatprep.mubr.f32.mxu0 0.0
    %566 = vmatmul.mubr.f32.gmra.mxu0 %v477
    %v567 = vpop.f32.mrf.mxu0
    %v568 = vadd.f32 %v499, %v567
    %v569 = vpop.f32.mrf.mxu0
    %570 = vdwg.mxu0
    %v571 = vmax.f32 %v568, 0.0
    %v572 = vadd.f32 %v571, %v383
    %v573 = vmax.f32 %v572, 0.0
    %v574 = vld [vmem:[#allocation10] sm:$0xff]
    %v575 = vld [vmem:[#allocation10 + $0x8] sm:$0xff]
    %v576 = vld [vmem:[#allocation10 + $0x10] sm:$0xff]
    %v577 = vld [vmem:[#allocation10 + $0x18] sm:$0xff]
    %v578 = vld [vmem:[#allocation10 + $0x20] sm:$0xff]
    %v579 = vld [vmem:[#allocation10 + $0x28] sm:$0xff]
    %v580 = vld [vmem:[#allocation10 + $0x30] sm:$0xff]
    %v581 = vld [vmem:[#allocation10 + $0x38] sm:$0xff]
    %v582 = vld [vmem:[#allocation10 + $0x40] sm:$0xff]
    %v583 = vld [vmem:[#allocation10 + $0x48] sm:$0xff]
    %v584 = vld [vmem:[#allocation10 + $0x50] sm:$0xff]
    %v585 = vld [vmem:[#allocation10 + $0x58] sm:$0xff]
    %v586 = vld [vmem:[#allocation10 + $0x60] sm:$0xff]
    %v587 = vld [vmem:[#allocation10 + $0x68] sm:$0xff]
    %v588 = vld [vmem:[#allocation10 + $0x70] sm:$0xff]
    %v589 = vld [vmem:[#allocation10 + $0x78] sm:$0xff]
    %v590 = vld [vmem:[%s13] sm:$0x3]
    %v591 = vld [vmem:[%s14] sm:$0x1]
    %593 = vset.pattern.permute.xlu0 0
    %594 = vperm.xlu0 %593, %v120
    %v595 = vpop.permute.xlu0 %594
    %v597 = vlaneseq
    %v598 = vshrl.u32 %v597, 7
    %v599 = vsub.s32 0, %v598
    %v600 = vrot.slane %v590, %v599
    %v601 = vmul.f32 %v595, %v600
    %602 = vmatprep.subr.mxu0 0.0
    %603 = vmatpush1.msra.mxu0 %v589
    %604 = vmatprep.subr.mxu0 0.0
    %605 = vmatpush1.msra.mxu0 %v588
    %606 = vmatprep.subr.mxu0 0.0
    %607 = vmatpush1.msra.mxu0 %v587
    %608 = vmatprep.subr.mxu0 0.0
    %609 = vmatpush1.msra.mxu0 %v586
    %610 = vmatprep.subr.mxu0 0.0
    %611 = vmatpush1.msra.mxu0 %v585
    %612 = vmatprep.subr.mxu0 0.0
    %613 = vmatpush1.msra.mxu0 %v584
    %614 = vmatprep.subr.mxu0 0.0
    %615 = vmatpush1.msra.mxu0 %v583
    %616 = vmatprep.subr.mxu0 0.0
    %617 = vmatpush1.msra.mxu0 %v582
    %618 = vmatprep.subr.mxu0 0.0
    %619 = vmatpush1.msra.mxu0 %v581
    %620 = vmatprep.subr.mxu0 0.0
    %621 = vmatpush1.msra.mxu0 %v580
    %622 = vmatprep.subr.mxu0 0.0
    %623 = vmatpush1.msra.mxu0 %v579
    %624 = vmatprep.subr.mxu0 0.0
    %625 = vmatpush1.msra.mxu0 %v578
    %626 = vmatprep.subr.mxu0 0.0
    %627 = vmatpush1.msra.mxu0 %v577
    %628 = vmatprep.subr.mxu0 0.0
    %629 = vmatpush1.msra.mxu0 %v576
    %630 = vmatprep.subr.mxu0 0.0
    %631 = vmatpush1.msra.mxu0 %v575
    %632 = vmatprep.subr.mxu0 0.0
    %633 = vmatpush1.msra.mxu0 %v574
    %634 = vmatprep.subr.mxu0 0.0
    %635 = vmatpush2.msra.mxu0 0.0
    %636 = vmatprep.subr.mxu0 0.0
    %637 = vmatpush2.msra.mxu0 0.0
    %638 = vmatprep.subr.mxu0 0.0
    %639 = vmatpush2.msra.mxu0 0.0
    %640 = vmatprep.subr.mxu0 0.0
    %641 = vmatpush2.msra.mxu0 0.0
    %642 = vmatprep.subr.mxu0 0.0
    %643 = vmatpush2.msra.mxu0 0.0
    %644 = vmatprep.subr.mxu0 0.0
    %645 = vmatpush2.msra.mxu0 0.0
    %646 = vmatprep.subr.mxu0 0.0
    %647 = vmatpush2.msra.mxu0 0.0
    %648 = vmatprep.subr.mxu0 0.0
    %649 = vmatpush2.msra.mxu0 0.0
    %650 = vmatprep.subr.mxu0 0.0
    %651 = vmatpush2.msra.mxu0 0.0
    %652 = vmatprep.subr.mxu0 0.0
    %653 = vmatpush2.msra.mxu0 0.0
    %654 = vmatprep.subr.mxu0 0.0
    %655 = vmatpush2.msra.mxu0 0.0
    %656 = vmatprep.subr.mxu0 0.0
    %657 = vmatpush2.msra.mxu0 0.0
    %658 = vmatprep.subr.mxu0 0.0
    %659 = vmatpush2.msra.mxu0 0.0
    %660 = vmatprep.subr.mxu0 0.0
    %661 = vmatpush2.msra.mxu0 0.0
    %662 = vmatprep.subr.mxu0 0.0
    %663 = vmatpush2.msra.mxu0 0.0
    %664 = vmatprep.subr.mxu0 0.0
    %665 = vmatpush2.msra.mxu0 0.0
    %666 = vmatprep.mubr.f32.mxu0 0.0
    %667 = vmatmul.mubr.f32.gmra.mxu0 %v573
    %v668 = vpop.f32.mrf.mxu0
    %v669 = vadd.f32 %v601, %v668
    %v670 = vpop.f32.mrf.mxu0
    %671 = vdwg.mxu0
    %672 = vset.pattern.permute.xlu0 1
    %673 = vperm.xlu0 %672, %v120
    %v674 = vpop.permute.xlu0 %673
    %v676 = vlaneseq
    %v677 = vshrl.u32 %v676, 7
    %v678 = vsub.s32 1, %v677
    %v679 = vrot.slane %v590, %v678
    %v680 = vmul.f32 %v674, %v679
    %v681 = vadd.f32 %v669, %v680
    %v683 = vlaneseq
    %v684 = vshrl.u32 %v683, 7
    %v685 = vsub.s32 0, %v684
    %v686 = vrot.slane %v591, %v685
    %v688 = vadd.f32 %v681, %v686
    %vm689 = vcmask 25600
    %690 = vst.msk [vmem:[#allocation11] sm:$0x3] %vm689, %v688
    // Predicated region
    $region82: #{low_resolution_tcn_forward.1} parent=1 // pred_check
      _
    $region83: #{low_resolution_tcn_forward.1} parent=1 // pred_check_branch
      %692 = sbr.rel (0) target = $region85
    $region84: #{low_resolution_tcn_forward.1} parent=1 // pred_region
      %s694 = ssub.s32 32, 32
      %695 = vsyncadd [#allocation4], %s694
      %s697 = sshll.u32 [#allocation11], 4
      %s698 = int_to_ptr.vmem [resolvable:$true] %s697
      %700 = dma.vmem_to_hbm [thread:$0]  %s698, 32, %s15, [#allocation4]
    $region85: #{low_resolution_tcn_forward.1} parent=1 // pred_fallthru
      _
    // Predicated region
    $region86: #{low_resolution_tcn_forward.1} parent=1 // pred_check
      _
    $region87: #{low_resolution_tcn_forward.1} parent=1 // pred_check_branch
      %702 = sbr.rel (0) target = $region89
    $region88: #{low_resolution_tcn_forward.1} parent=1 // pred_region
      %703 = dma.done [#allocation4], 32
    $region89: #{low_resolution_tcn_forward.1} parent=1 // pred_fallthru
      _
    %704 = vsyncpa [#allocation3], 1
    %705 = vsyncpa [#allocation6], 1
    %706 = vsyncpa [#allocation9], 1
    %707 = vsyncpa [#allocation4], 1

</llo_original>
